<compile_context>
chip_gen: v6e
topology: v6e:2x2x1
jax: 0.10.0
libtpu: 0.0.40
codegen_flags: <defaults>
</compile_context>

<pallas_src>
import functools

import numpy as np
import jax
import jax.numpy as jnp
from jax.experimental import pallas as pl
from jax.experimental.pallas import tpu as pltpu

MIB = 1024 * 1024
_LANE = 128      # vreg lane width
_SUBLANE = 8     # vreg sublane count (f32)


# --------------------------------------------------------------------------
# helpers
# --------------------------------------------------------------------------
def _cdiv(a, b):
    return -(-a // b)


def _as_static_scalar(v, name):
    if v is None:
        return None
    if isinstance(v, (int, float, np.integer, np.floating)):
        return float(v)
    # TODO(synk): tensor-valued mean/std targets are not supported; only None
    # or python scalars (the way the module is exercised here).
    raise NotImplementedError(f"{name} must be None or a python scalar")


def _tpu_vmem_bytes():
    try:
        info = pltpu.get_tpu_info()
        return int(getattr(info, "vmem_capacity_bytes", 64 * MIB))
    except Exception:
        return 64 * MIB  # conservative (v7x per-TensorCore)


def _budgets(max_block_bytes=None):
    vmem = _tpu_vmem_bytes()
    vmem_limit = int(min(96 * MIB, max(32 * MIB, 0.75 * vmem)))
    if max_block_bytes is None:
        # Live VMEM is ~2*in + 2*out + a few f32 temps per block, so /8 keeps
        # headroom: ~12 MiB blocks on 128 MiB parts, ~6 MiB on 64 MiB v7x.
        max_block_bytes = vmem_limit // 8
    return vmem_limit, int(max_block_bytes)


_CORE_PARALLEL = None


def _core_parallel_enabled():
    global _CORE_PARALLEL
    if _CORE_PARALLEL is None:
        ok = False
        try:
            kind = jax.devices()[0].device_kind.lower()
            ok = (("v7" in kind) or ("7x" in kind)) and hasattr(pltpu, "CORE_PARALLEL")
        except Exception:
            ok = False
        _CORE_PARALLEL = ok
    return _CORE_PARALLEL


def _compiler_params(semantics, vmem_limit):
    sems = tuple(semantics)
    if _core_parallel_enabled() and sems and sems[0] == "parallel":
        conv = {"parallel": getattr(pltpu, "PARALLEL", "parallel"),
                "arbitrary": getattr(pltpu, "ARBITRARY", "arbitrary")}
        sems = (pltpu.CORE_PARALLEL,) + tuple(conv.get(s, s) for s in sems[1:])
    return pltpu.CompilerParams(dimension_semantics=sems,
                                vmem_limit_bytes=int(vmem_limit))


def _global_reshape(total):
    """Best exact (rows, cols) factorization of a flat vector: prefers
    lane-dense cols (multiple of 128) and sublane-friendly rows, no padding."""
    best_key, best = (-1, -1, -(1 << 60)), (1, total)
    c = 1
    while c * c <= total:
        if total % c == 0:
            for cols in (c, total // c):
                rows = total // cols
                if cols > 65536 or rows > (1 << 20):
                    continue
                key = (int(cols % _LANE == 0), int(rows % _SUBLANE == 0),
                       -abs(cols - 2048))
                if key > best_key:
                    best_key, best = key, (rows, cols)
        c += 1
    # TODO(synk): prime totals fall back to (1, total) (wastes sublanes).
    return best


# --------------------------------------------------------------------------
# kernels
# --------------------------------------------------------------------------
def _global_normalize_kernel(x_ref, o_ref, *, eps, n, target_mean, target_std):
    """dim=None: single block holding the whole (reshaped) tensor."""
    x = x_ref[...].astype(jnp.float32)                       # (R, C) full array
    s = jnp.sum(jnp.sum(x, axis=-1, keepdims=True), axis=0, keepdims=True)
    mean = s / jnp.float32(n)
    c = x - mean
    ss = jnp.sum(jnp.sum(c * c, axis=-1, keepdims=True), axis=0, keepdims=True)
    std = jnp.sqrt(ss / jnp.float32(n - 1))                  # ddof=1 (torch.std)
    t_std = std if target_std is None else jnp.float32(target_std)
    t_mean = mean if target_mean is None else jnp.float32(target_mean)
    scale = t_std * pl.reciprocal(std + jnp.float32(eps), approx=False)
    o_ref[...] = (c * scale + t_mean).astype(o_ref.dtype)


def _row_normalize_kernel(x_ref, o_ref, *, eps, n, target_mean, target_std):
    """Single-pass per-row normalization, reduce over the last (lane) axis.
    Ragged trailing row blocks are safe: stats are per-row and OOB stores are
    dropped by Pallas."""
    x = x_ref[...].astype(jnp.float32)                       # (row_blk, cols)
    mean = jnp.sum(x, axis=-1, keepdims=True) / jnp.float32(n)
    c = x - mean
    var = jnp.sum(c * c, axis=-1, keepdims=True) / jnp.float32(n - 1)
    std = jnp.sqrt(var)
    t_std = std if target_std is None else jnp.float32(target_std)
    t_mean = mean if target_mean is None else jnp.float32(target_mean)
    scale = t_std * pl.reciprocal(std + jnp.float32(eps), approx=False)
    o_ref[...] = (c * scale + t_mean).astype(o_ref.dtype)


def _mid_normalize_kernel(x_ref, o_ref, *, eps, n, target_mean, target_std):
    """Single-pass reduce over the middle (sublane) axis; several `pre` rows per
    block; trailing kept axis stays lane-dense so stores are unmasked."""
    x = x_ref[...].astype(jnp.float32)                # (pre_blk, red, post_blk)
    mean = jnp.sum(x, axis=1, keepdims=True) / jnp.float32(n)
    c = x - mean
    var = jnp.sum(c * c, axis=1, keepdims=True) / jnp.float32(n - 1)
    std = jnp.sqrt(var)
    t_std = std if target_std is None else jnp.float32(target_std)
    t_mean = mean if target_mean is None else jnp.float32(target_mean)
    scale = t_std * pl.reciprocal(std + jnp.float32(eps), approx=False)
    o_ref[...] = (c * scale + t_mean).astype(o_ref.dtype)


def _col_stats_kernel(x_ref, sum_ref, m2_ref, *, cols, col_blk):
    """Fused stats pass (reduce over lanes, column-tiled): per-(row, col-tile)
    sum and M2-about-tile-mean, with in-kernel masking of the ragged tile."""
    j = pl.program_id(1)
    x = x_ref[...].astype(jnp.float32)                       # (row_blk, col_blk)
    col0 = j * col_blk
    lane = jax.lax.broadcasted_iota(jnp.int32, x.shape, 1)
    mask = (col0 + lane) < cols
    cnt = jnp.minimum(cols - col0, col_blk).astype(jnp.float32)
    xm = jnp.where(mask, x, 0.0)
    s = jnp.sum(xm, axis=-1, keepdims=True)                  # (row_blk, 1)
    mean_t = s / cnt
    d = jnp.where(mask, x - mean_t, 0.0)
    m2 = jnp.sum(d * d, axis=-1, keepdims=True)
    sum_ref[0] = s
    m2_ref[0] = m2


def _apply_rows_kernel(x_ref, a_ref, b_ref, o_ref):
    """Streaming apply with precomputed per-row scale/shift: out = x*a + b."""
    o_ref[...] = (x_ref[...].astype(jnp.float32) * a_ref[...]
                  + b_ref[...]).astype(o_ref.dtype)


def _mid_stats_kernel(x_ref, sum_ref, m2_ref, *, red, red_blk):
    """Fused stats pass for middle-axis reduction, reduce-axis tiled."""
    r = pl.program_id(2)
    x = x_ref[...].astype(jnp.float32)           # (pre_blk, red_blk, post_blk)
    r0 = r * red_blk
    sub = jax.lax.broadcasted_iota(jnp.int32, x.shape[1:], 0)   # (red_blk, post)
    mask = (r0 + sub) < red
    cnt = jnp.minimum(red - r0, red_blk).astype(jnp.float32)
    xm = jnp.where(mask[None], x, 0.0)
    s = jnp.sum(xm, axis=1, keepdims=True)       # (pre_blk, 1, post_blk)
    mean_t = s / cnt
    d = jnp.where(mask[None], x - mean_t, 0.0)
    m2 = jnp.sum(d * d, axis=1, keepdims=True)
    sum_ref[0] = s[:, 0, :]
    m2_ref[0] = m2[:, 0, :]


def _mid_apply_kernel(x_ref, a_ref, b_ref, o_ref):
    """Streaming apply for middle-axis path: out = x*a + b (a/b per (pre,post))."""
    o_ref[...] = (x_ref[...].astype(jnp.float32) * a_ref[...]
                  + b_ref[...]).astype(o_ref.dtype)


# --------------------------------------------------------------------------
# stat combination (Chan parallel-variance; no E[x^2]-mean^2 cancellation)
# --------------------------------------------------------------------------
def _combine_rowwise(tile_sum, tile_m2, counts, n):
    """tile_sum/tile_m2: (T, rows, 1) partials; counts: (T,) f32."""
    cj = counts[:, None, None]
    total = jnp.sum(tile_sum, axis=0)
    mean = total / jnp.float32(n)
    tmean = tile_sum / cj
    m2 = jnp.sum(tile_m2, axis=0) + jnp.sum(cj * (tmean - mean[None]) ** 2, axis=0)
    # NOTE: n == 1 yields 0/0 = NaN here, matching torch.std(unbiased=True).
    std = jnp.sqrt(jnp.maximum(m2, 0.0) / jnp.float32(n - 1))
    return mean, std


def _combine_global(tile_sum, tile_m2, counts, n):
    cj = jnp.broadcast_to(counts[:, None, None], tile_sum.shape).reshape(-1)
    ts = tile_sum.reshape(-1)
    tm2 = tile_m2.reshape(-1)
    mean = jnp.sum(ts) / jnp.float32(n)
    tmean = ts / cj
    m2 = jnp.sum(tm2) + jnp.sum(cj * (tmean - mean) ** 2)
    std = jnp.sqrt(jnp.maximum(m2, 0.0) / jnp.float32(n - 1))
    return mean, std


# --------------------------------------------------------------------------
# 2-D engines (rows x reduce_len, reduce over the last axis)
# --------------------------------------------------------------------------
def _normalize_2d_tiled(x2, n_reduce, *, target_mean, target_std, eps,
                        global_stats, vmem_limit, max_block_bytes):
    rows, cols = x2.shape

    col_cap = (cols // _LANE) * _LANE
    if col_cap == 0:
        col_blk = cols                                   # full dim (legal)
    else:
        budget_cols = (max_block_bytes // (_SUBLANE * 4)) // _LANE * _LANE
        col_blk = min(max(_LANE, budget_cols), col_cap)
    if rows <= _SUBLANE:
        row_blk = rows
    else:
        row_blk = max(_SUBLANE,
                      (max_block_bytes // max(col_blk * 4, 1)) // _SUBLANE * _SUBLANE)
        row_blk = min(row_blk, (rows // _SUBLANE) * _SUBLANE)

    nrt, nct = _cdiv(rows, row_blk), _cdiv(cols, col_blk)
    counts = np.full((nct,), float(col_blk), np.float32)
    counts[-1] = float(cols - (nct - 1) * col_blk)
    counts_j = jnp.asarray(counts)

    grid = (nrt, nct)
    x_spec = pl.BlockSpec((row_blk, col_blk), lambda i, j: (i, j))
    stat_out_spec = pl.BlockSpec((1, row_blk, 1), lambda i, j: (j, i, 0))
    stat_in_spec = pl.BlockSpec((row_blk, 1), lambda i, j: (i, 0))

    # Pass 1 (single read): per-(row, col-tile) sum and M2.
    stats_kernel = functools.partial(_col_stats_kernel, cols=cols, col_blk=col_blk)
    tile_sum, tile_m2 = pl.pallas_call(
        stats_kernel,
        out_shape=(jax.ShapeDtypeStruct((nct, rows, 1), jnp.float32),
                   jax.ShapeDtypeStruct((nct, rows, 1), jnp.float32)),
        grid=grid,
        in_specs=[x_spec],
        out_specs=(stat_out_spec, stat_out_spec),
        compiler_params=_compiler_params(("parallel", "parallel"), vmem_limit),
    )(x2)

    if global_stats:
        mean_s, std_s = _combine_global(tile_sum, tile_m2, counts_j, n_reduce)
        mean_rows = jnp.full((rows, 1), mean_s, jnp.float32)
        std_rows = jnp.full((rows, 1), std_s, jnp.float32)
    else:
        mean_rows, std_rows = _combine_rowwise(tile_sum, tile_m2, counts_j, n_reduce)

    t_std = std_rows if target_std is None else jnp.float32(target_std)
    t_mean = mean_rows if target_mean is None else jnp.float32(target_mean)
    scale_rows = (t_std / (std_rows + jnp.float32(eps))).astype(jnp.float32)
    shift_rows = (t_mean - mean_rows * scale_rows).astype(jnp.float32)

    # Pass 2 (read + write): out = x*scale + shift.
    return pl.pallas_call(
        _apply_rows_kernel,
        out_shape=jax.ShapeDtypeStruct((rows, cols), x2.dtype),
        grid=grid,
        in_specs=[x_spec, stat_in_spec, stat_in_spec],
        out_specs=x_spec,
        compiler_params=_compiler_params(("parallel", "parallel"), vmem_limit),
    )(x2, scale_rows, shift_rows)


def _normalize_2d(x2, n_reduce, *, target_mean, target_std, eps,
                  global_stats, vmem_limit, max_block_bytes):
    rows, cols = x2.shape

    if global_stats:
        if rows * cols * 4 <= max_block_bytes:
            kern = functools.partial(_global_normalize_kernel, eps=eps,
                                     n=n_reduce, target_mean=target_mean,
                                     target_std=target_std)
            return pl.pallas_call(
                kern,
                out_shape=jax.ShapeDtypeStruct((rows, cols), x2.dtype),
                grid=(1,),
                in_specs=[pl.BlockSpec((rows, cols), lambda i: (0, 0))],
                out_specs=pl.BlockSpec((rows, cols), lambda i: (0, 0)),
                compiler_params=_compiler_params(("arbitrary",), vmem_limit),
            )(x2)
        return _normalize_2d_tiled(
            x2, n_reduce, target_mean=target_mean, target_std=target_std,
            eps=eps, global_stats=True, vmem_limit=vmem_limit,
            max_block_bytes=max_block_bytes)

    # Single-pass fast path: whole reduce axis inside one block width.
    if cols <= _LANE or cols * _SUBLANE * 4 <= max_block_bytes:
        if rows <= _SUBLANE:
            row_blk = rows
        else:
            row_blk = max(_SUBLANE,
                          (max_block_bytes // max(cols * 4, 1)) // _SUBLANE * _SUBLANE)
            row_blk = min(row_blk, (rows // _SUBLANE) * _SUBLANE)
        kern = functools.partial(_row_normalize_kernel, eps=eps, n=n_reduce,
                                 target_mean=target_mean, target_std=target_std)
        return pl.pallas_call(
            kern,
            out_shape=jax.ShapeDtypeStruct((rows, cols), x2.dtype),
            grid=(_cdiv(rows, row_blk),),
            in_specs=[pl.BlockSpec((row_blk, cols), lambda i: (i, 0))],
            out_specs=pl.BlockSpec((row_blk, cols), lambda i: (i, 0)),
            compiler_params=_compiler_params(("parallel",), vmem_limit),
        )(x2)

    return _normalize_2d_tiled(
        x2, n_reduce, target_mean=target_mean, target_std=target_std,
        eps=eps, global_stats=False, vmem_limit=vmem_limit,
        max_block_bytes=max_block_bytes)


# --------------------------------------------------------------------------
# 3-D engines: (pre, reduce, post) with a lane-dense trailing kept axis
# --------------------------------------------------------------------------
def _normalize_mid_tiled(x3, *, target_mean, target_std, eps,
                         vmem_limit, max_block_bytes):
    pre, red, post = x3.shape
    post_blk = post if post < _LANE else _LANE
    pre_reserve = pre if pre < _SUBLANE else _SUBLANE
    red_budget = max(1, max_block_bytes // max(pre_reserve * post_blk * 4, 1))
    red_blk = max(_SUBLANE, (red_budget // _SUBLANE) * _SUBLANE)
    if red_blk >= red:
        red_blk = red
    if pre <= _SUBLANE:
        pre_blk = pre
    else:
        pre_blk = max(_SUBLANE,
                      (max_block_bytes // max(red_blk * post_blk * 4, 1))
                      // _SUBLANE * _SUBLANE)
        pre_blk = min(pre_blk, (pre // _SUBLANE) * _SUBLANE)

    npre, npost, nred = _cdiv(pre, pre_blk), _cdiv(post, post_blk), _cdiv(red, red_blk)
    counts = np.full((nred,), float(red_blk), np.float32)
    counts[-1] = float(red - (nred - 1) * red_blk)
    counts_j = jnp.asarray(counts)

    grid = (npre, npost, nred)
    x_spec = pl.BlockSpec((pre_blk, red_blk, post_blk), lambda i, j, r: (i, r, j))
    stat_out_spec = pl.BlockSpec((1, pre_blk, post_blk), lambda i, j, r: (r, i, j))
    stat_in_spec = pl.BlockSpec((pre_blk, 1, post_blk), lambda i, j, r: (i, 0, j))

    stats_kernel = functools.partial(_mid_stats_kernel, red=red, red_blk=red_blk)
    tile_sum, tile_m2 = pl.pallas_call(
        stats_kernel,
        out_shape=(jax.ShapeDtypeStruct((nred, pre, post), jnp.float32),
                   jax.ShapeDtypeStruct((nred, pre, post), jnp.float32)),
        grid=grid,
        in_specs=[x_spec],
        out_specs=(stat_out_spec, stat_out_spec),
        compiler_params=_compiler_params(("parallel", "parallel", "parallel"),
                                         vmem_limit),
    )(x3)

    cj = counts_j[:, None, None]
    total = jnp.sum(tile_sum, axis=0)                    # (pre, post)
    mean = total / jnp.float32(red)
    tmean = tile_sum / cj
    m2 = jnp.sum(tile_m2, axis=0) + jnp.sum(cj * (tmean - mean[None]) ** 2, axis=0)
    std = jnp.sqrt(jnp.maximum(m2, 0.0) / jnp.float32(red - 1))

    t_std = std if target_std is None else jnp.float32(target_std)
    t_mean = mean if target_mean is None else jnp.float32(target_mean)
    scale2 = (t_std / (std + jnp.float32(eps))).astype(jnp.float32)
    shift2 = (t_mean - mean * scale2).astype(jnp.float32)
    scale3 = scale2.reshape(pre, 1, post)
    shift3 = shift2.reshape(pre, 1, post)

    return pl.pallas_call(
        _mid_apply_kernel,
        out_shape=jax.ShapeDtypeStruct((pre, red, post), x3.dtype),
        grid=grid,
        in_specs=[x_spec, stat_in_spec, stat_in_spec],
        out_specs=x_spec,
        compiler_params=_compiler_params(("parallel", "parallel", "parallel"),
                                         vmem_limit),
    )(x3, scale3, shift3)


def _normalize_mid(x3, *, target_mean, target_std, eps,
                   vmem_limit, max_block_bytes):
    pre, red, post = x3.shape
    if red * min(post, _LANE) * 4 <= max_block_bytes:
        # Single pass, reduce over sublanes; several pre rows per block.
        if post <= _LANE:
            post_blk = post
        else:
            budget_post = (max_block_bytes // max(red * 4, 1)) // _LANE * _LANE
            post_blk = min(max(_LANE, budget_post), (post // _LANE) * _LANE)
        pre_blk = max(1, max_block_bytes // max(red * post_blk * 4, 1))
        pre_blk = min(pre_blk, pre)
        kern = functools.partial(_mid_normalize_kernel, eps=eps, n=red,
                                 target_mean=target_mean, target_std=target_std)
        return pl.pallas_call(
            kern,
            out_shape=jax.ShapeDtypeStruct((pre, red, post), x3.dtype),
            grid=(_cdiv(pre, pre_blk), _cdiv(post, post_blk)),
            in_specs=[pl.BlockSpec((pre_blk, red, post_blk),
                                   lambda i, j: (i, 0, j))],
            out_specs=pl.BlockSpec((pre_blk, red, post_blk),
                                   lambda i, j: (i, 0, j)),
            compiler_params=_compiler_params(("parallel", "parallel"), vmem_limit),
        )(x3)
    # Reduce axis too big for one block: reduce-tiled two-pass (no transpose).
    return _normalize_mid_tiled(
        x3, target_mean=target_mean, target_std=target_std, eps=eps,
        vmem_limit=vmem_limit, max_block_bytes=max_block_bytes)


# --------------------------------------------------------------------------
# public wrapper (matches Normalize(mean, std, dim, eps).forward)
# --------------------------------------------------------------------------
def normalize(x, mean=None, std=None, dim=None, eps=1e-12, *,
              max_block_bytes=None):
    target_mean = _as_static_scalar(mean, "mean")
    target_std = _as_static_scalar(std, "std")
    vmem_limit, max_block_bytes = _budgets(max_block_bytes)

    orig_shape = x.shape
    ndim = x.ndim
    if dim is None:
        red_axes = tuple(range(ndim))
    elif isinstance(dim, int):
        red_axes = (dim % ndim,)
    else:
        red_axes = tuple(sorted(d % ndim for d in dim))
    if not red_axes:
        red_axes = tuple(range(ndim))
    keep_axes = tuple(a for a in range(ndim) if a not in red_axes)
    n_reduce = int(np.prod([orig_shape[a] for a in red_axes]))

    # --- all axes reduced (dim=None): global stats -----------------------
    if not keep_axes:
        total = int(np.prod(orig_shape))
        r, c = _global_reshape(total)
        x2 = x.reshape(r, c)
        out2 = _normalize_2d(x2, total, target_mean=target_mean,
                             target_std=target_std, eps=eps, global_stats=True,
                             vmem_limit=vmem_limit,
                             max_block_bytes=max_block_bytes)
        return out2.reshape(orig_shape)

    contiguous = red_axes == tuple(range(red_axes[0], red_axes[-1] + 1))
    if contiguous:
        pre_axes = tuple(a for a in keep_axes if a < red_axes[0])
        post_axes = tuple(a for a in keep_axes if a > red_axes[-1])
        pre = int(np.prod([orig_shape[a] for a in pre_axes])) if pre_axes else 1
        post = int(np.prod([orig_shape[a] for a in post_axes])) if post_axes else 1

        if not post_axes:
            # Trailing reduce dims (e.g. dim=(2,3) on NCHW): free reshape,
            # reduce over the lane axis.
            x2 = x.reshape(pre, n_reduce)
            out2 = _normalize_2d(x2, n_reduce, target_mean=target_mean,
                                 target_std=target_std, eps=eps,
                                 global_stats=False, vmem_limit=vmem_limit,
                                 max_block_bytes=max_block_bytes)
            return out2.reshape(orig_shape)

        # Middle-axis reduce (e.g. dim=1 on NCHW): no wrapper transpose; the
        # kept trailing axes stay lane-dense.
        x3 = x.reshape(pre, n_reduce, post)
        out3 = _normalize_mid(x3, target_mean=target_mean,
                              target_std=target_std, eps=eps,
                              vmem_limit=vmem_limit,
                              max_block_bytes=max_block_bytes)
        return out3.reshape(orig_shape)

    # --- general fallback: non-contiguous reduce axes --------------------
    # TODO(synk): non-contiguous reduce-axis sets still pay an XLA transpose
    # (extra HBM pass) on each side of the kernel.
    perm = keep_axes + red_axes
    xt = jnp.transpose(x, perm)
    rows = int(np.prod([orig_shape[a] for a in keep_axes]))
    x2 = xt.reshape(rows, n_reduce)
    out2 = _normalize_2d(x2, n_reduce, target_mean=target_mean,
                         target_std=target_std, eps=eps, global_stats=False,
                         vmem_limit=vmem_limit, max_block_bytes=max_block_bytes)
    out_t = out2.reshape([orig_shape[a] for a in perm])
    inv_perm = tuple(int(p) for p in np.argsort(perm))
    return jnp.transpose(out_t, inv_perm)


# --------------------------------------------------------------------------
# pure-JAX reference (mirrors the PyTorch forward; torch.std is unbiased)
# --------------------------------------------------------------------------
def _normalize_ref(x, mean=None, std=None, dim=None, eps=1e-12):
    x_mean = jnp.mean(x, axis=dim, keepdims=True)
    target_mean = mean if mean is not None else x_mean
    x_std = jnp.std(x, axis=dim, keepdims=True, ddof=1)
    target_std = std if std is not None else x_std
    return target_std * (x - x_mean) / (x_std + eps) + target_mean


if __name__ == "__main__":
    key = jax.random.PRNGKey(0)
    k1, k2, k3, k4 = jax.random.split(key, 4)
    # NCHW-style input (like the PyTorch module's conv inputs) plus a few odd
    # shapes that exercise ragged row blocks / ragged column tiles.
    x = jax.random.normal(k1, (2, 4, 16, 16), dtype=jnp.float32) * 3.0 + 1.5
    y = jax.random.normal(k2, (2, 20, 48), dtype=jnp.float32) * 2.0 - 0.7
    z = jax.random.normal(k3, (10, 300), dtype=jnp.float32) * 1.3 + 4.0
    w = jax.random.normal(k4, (6, 200), dtype=jnp.float32) * 0.5 + 2.0

    checks = []

    def _check(name, arr, cfg, **extra):
        out = jax.block_until_ready(normalize(arr, **cfg, **extra))
        ref = _normalize_ref(arr, **cfg)
        checks.append((name, bool(jnp.allclose(out, ref, atol=1e-5, rtol=1e-5))))

    # Single-pass paths (default budgets).
    _check("global", x, dict(mean=None, std=None, dim=None))
    _check("spatial", x, dict(mean=0.0, std=1.0, dim=(2, 3)))
    _check("channel", x, dict(mean=None, std=None, dim=1))
    _check("rows_ragged", z, dict(mean=None, std=None, dim=-1))
    _check("noncontig", x, dict(mean=None, std=None, dim=(0, 2)))

    # Tiny budgets force the fused-stats tiled paths (col-tiled, red-tiled)
    # with ragged-tile masking on these small inputs.
    _check("global_tiled", x, dict(mean=None, std=None, dim=None),
           max_block_bytes=2048)
    _check("spatial_tiled", x, dict(mean=0.0, std=1.0, dim=(2, 3)),
           max_block_bytes=1024)
    _check("mid_tiled", y, dict(mean=None, std=None, dim=1),
           max_block_bytes=1024)
    _check("row_tiled_ragged", w, dict(mean=1.0, std=2.0, dim=-1),
           max_block_bytes=1024)

    if all(ok for _, ok in checks):
        print("KERNEL_OK")
    else:
        raise SystemExit(f"mismatch vs reference: {checks}")
</pallas_src>

<mosaic_0001>
module attributes {stable_mosaic.version = 11 : i64} {
  func.func @_global_normalize_kernel(%arg0: i32, %arg1: memref<8x256xf32, #tpu.memory_space<vmem>>, %arg2: memref<8x256xf32, #tpu.memory_space<vmem>>) attributes {dimension_semantics = [#tpu.dimension_semantics<arbitrary>], iteration_bounds = array<i64: 1>, scalar_prefetch = 0 : i64, scratch_operands = 0 : i64, tpu.core_type = #tpu.core_type<tc>, window_params = [{pipeline_mode = #tpu.pipeline_mode<synchronous>, transform_indices = @transform_0, window_bounds = array<i64: 8, 256>}, {pipeline_mode = #tpu.pipeline_mode<synchronous>, transform_indices = @transform_1, window_bounds = array<i64: 8, 256>}]} {
    %c0 = arith.constant 0 : index
    %c0_0 = arith.constant 0 : index
    %0 = vector.load %arg1[%c0, %c0_0] : memref<8x256xf32, #tpu.memory_space<vmem>>, vector<8x256xf32>
    %cst = arith.constant dense<0.000000e+00> : vector<8xf32>
    %1 = vector.multi_reduction <add>, %0, %cst [1] : vector<8x256xf32> to vector<8xf32>
    %2 = vector.shape_cast %1 : vector<8xf32> to vector<8x1xf32>
    %cst_1 = arith.constant dense<0.000000e+00> : vector<1xf32>
    %3 = vector.multi_reduction <add>, %2, %cst_1 [0] : vector<8x1xf32> to vector<1xf32>
    %4 = vector.shape_cast %3 : vector<1xf32> to vector<1x1xf32>
    %cst_2 = arith.constant 2.048000e+03 : f32
    %5 = vector.broadcast %cst_2 : f32 to vector<1x1xf32>
    %6 = arith.divf %4, %5 : vector<1x1xf32>
    %7 = vector.broadcast %6 : vector<1x1xf32> to vector<8x256xf32>
    %8 = arith.subf %0, %7 : vector<8x256xf32>
    %9 = arith.mulf %8, %8 : vector<8x256xf32>
    %cst_3 = arith.constant dense<0.000000e+00> : vector<8xf32>
    %10 = vector.multi_reduction <add>, %9, %cst_3 [1] : vector<8x256xf32> to vector<8xf32>
    %11 = vector.shape_cast %10 : vector<8xf32> to vector<8x1xf32>
    %cst_4 = arith.constant dense<0.000000e+00> : vector<1xf32>
    %12 = vector.multi_reduction <add>, %11, %cst_4 [0] : vector<8x1xf32> to vector<1xf32>
    %13 = vector.shape_cast %12 : vector<1xf32> to vector<1x1xf32>
    %cst_5 = arith.constant 2.047000e+03 : f32
    %14 = vector.broadcast %cst_5 : f32 to vector<1x1xf32>
    %15 = arith.divf %13, %14 : vector<1x1xf32>
    %16 = math.sqrt %15 : vector<1x1xf32>
    %cst_6 = arith.constant 9.99999996E-13 : f32
    %17 = vector.broadcast %cst_6 : f32 to vector<1x1xf32>
    %18 = arith.addf %16, %17 : vector<1x1xf32>
    %19 = tpu.reciprocal %18 : vector<1x1xf32> -> vector<1x1xf32>
    %20 = arith.mulf %16, %19 : vector<1x1xf32>
    %21 = vector.broadcast %20 : vector<1x1xf32> to vector<8x256xf32>
    %22 = arith.mulf %8, %21 : vector<8x256xf32>
    %23 = vector.broadcast %6 : vector<1x1xf32> to vector<8x256xf32>
    %24 = arith.addf %22, %23 : vector<8x256xf32>
    %c0_7 = arith.constant 0 : index
    %c0_8 = arith.constant 0 : index
    %25 = vector.load %arg2[%c0_7, %c0_8] : memref<8x256xf32, #tpu.memory_space<vmem>>, vector<8x256xf32>
    tpu.vector_store %arg2[%c0_7, %c0_8], %24 {strides = array<i32>} : memref<8x256xf32, #tpu.memory_space<vmem>>, vector<8x256xf32>,
    return
  }
  func.func @transform_0(%arg0: i32) -> (i32, i32) {
    %c0_i32 = arith.constant 0 : i32
    %c0_i32_0 = arith.constant 0 : i32
    %c0_i32_1 = arith.constant 0 : i32
    return %c0_i32, %c0_i32_0 : i32, i32
  }
  func.func @transform_1(%arg0: i32) -> (i32, i32) {
    %c0_i32 = arith.constant 0 : i32
    %c0_i32_0 = arith.constant 0 : i32
    %c0_i32_1 = arith.constant 0 : i32
    return %c0_i32, %c0_i32_0 : i32, i32
  }
}

</mosaic_0001>

<llo_original>
// kernel: tpu_custom_call.1
$region0: #{tpu_custom_call.1}
  #allocation0 [shape = 'u32[]', space=smem, size = 0x4, offset = 0x4, fixed_abs, tag = 'smem constant byte address 0x4 - core index']
  #allocation1 [shape = 'u32[144,128]{1,0:T(1,128)}', space=vmem, size = 0x12000, scoped, tag = 'internal scratch']
  %s0 = inlined_call_operand.hbm [shape: f32[8,256], index: 0, kind: input, shape index: {}]
  %s1 = inlined_call_operand.hbm [shape: f32[8,256], index: 1, kind: output, shape index: {}]
  %s2 = sld [smem:[#allocation0]]
  $region18: #{tpu_custom_call.1} parent=0
    _
  %s4 = ssub.s32 1, %s2
  %s5 = scalar_select 0, %s4, %s2
  $region1: #{tpu_custom_call.1} parent=0
    #allocation2 [shape = 'u8[8192]{0}', space=vmem, size = 0x2000, scoped, tag = 'input window, operand 0, single buffered']
    #allocation3 [shape = 's32[1]{0}', space=sflag, size = 0x4, scoped, tag = 'scoped memory for tpu_custom_call.1']
    #allocation4 [shape = 's32[1]{0}', space=sflag, size = 0x4, scoped, tag = 'scoped memory for tpu_custom_call.1']
    #allocation5 [shape = 'u8[8192]{0}', space=vmem, size = 0x2000, scoped, tag = 'output window, operand 0, single buffered']
    %6 = vsyncpa [#allocation3], 0
    %7 = vsyncpa [#allocation4], 0
    // Predicated region
    $region2: #{tpu_custom_call.1} parent=1 // pred_check
      _
    $region3: #{tpu_custom_call.1} parent=1 // pred_check_branch
      %9 = sbr.rel (0) target = $region5
    $region4: #{tpu_custom_call.1} parent=1 // pred_region
      %s11 = ssub.s32 256, 256
      %12 = vsyncadd [#allocation3], %s11
      %s14 = sshll.u32 [#allocation2], 4
      %s15 = int_to_ptr.vmem [resolvable:$true] %s14
      %17 = dma.hbm_to_vmem [thread:$0]  %s0, 256, %s15, [#allocation3]
    $region5: #{tpu_custom_call.1} parent=1 // pred_fallthru
      _
    // Predicated region
    $region6: #{tpu_custom_call.1} parent=1 // pred_check
      _
    $region7: #{tpu_custom_call.1} parent=1 // pred_check_branch
      %19 = sbr.rel (0) target = $region9
    $region8: #{tpu_custom_call.1} parent=1 // pred_region
      %20 = dma.done [#allocation3], 256
    $region9: #{tpu_custom_call.1} parent=1 // pred_fallthru
      _
    %v21 = vld [vmem:[#allocation2] sm:$0xff]
    %v22 = vld [vmem:[#allocation2 + $0x8] sm:$0xff]
    %v23 = vadd.f32 %v21, %v22
    %24 = vadd.xlane.f32.xlu0 %v23
    %v25 = vpop.xlane.xlu0 %24
    %v26 = vrot.slane %v25, 4
    %v27 = vadd.f32 %v25, %v26
    %v28 = vrot.slane %v27, 2
    %v29 = vadd.f32 %v27, %v28
    %v30 = vrot.slane %v29, 1
    %v31 = vadd.f32 %v29, %v30
    %v32 = vrcp.pop 2048.0
    %v33 = vmul.f32 %v31, %v32
    %v34 = vsub.f32 %v21, %v33
    %v35 = vsub.f32 %v22, %v33
    %v36 = vmul.f32 %v34, %v34
    %v37 = vmul.f32 %v35, %v35
    %v38 = vadd.f32 %v36, %v37
    %39 = vadd.xlane.f32.xlu0 %v38
    %v40 = vpop.xlane.xlu0 %39
    %v41 = vrot.slane %v40, 4
    %v42 = vadd.f32 %v40, %v41
    %v43 = vrot.slane %v42, 2
    %v44 = vadd.f32 %v42, %v43
    %v45 = vrot.slane %v44, 1
    %v46 = vadd.f32 %v44, %v45
    %v47 = vrcp.pop 2047.0
    %v48 = vmul.f32 %v46, %v47
    %v49 = vrsqrt.pop %v48
    %v50 = vmul.f32 %v48, %v49
    %vm51 = vcmp.eq.f32.partialorder %v48, inf
    %v52 = vsel %vm51, %v48, %v50
    %vm53 = vcmp.eq.f32.partialorder %v48, 0.0
    %v54 = vand.u32 %v48, 2147483648
    %v55 = vsel %vm53, %v54, %v52
    %v56 = vadd.f32 %v55, 1e-12
    %v57 = vrcp.pop %v56
    %v58 = vmul.f32 %v55, %v57
    %v59 = vmul.f32 %v34, %v58
    %v60 = vmul.f32 %v35, %v58
    %v61 = vadd.f32 %v59, %v33
    %v62 = vadd.f32 %v60, %v33
    %63 = vst [vmem:[#allocation5] sm:$0xff] %v61
    %64 = vst [vmem:[#allocation5 + $0x8] sm:$0xff] %v62
    // Predicated region
    $region10: #{tpu_custom_call.1} parent=1 // pred_check
      _
    $region11: #{tpu_custom_call.1} parent=1 // pred_check_branch
      %66 = sbr.rel (0) target = $region13
    $region12: #{tpu_custom_call.1} parent=1 // pred_region
      %s68 = ssub.s32 256, 256
      %69 = vsyncadd [#allocation4], %s68
      %s71 = sshll.u32 [#allocation5], 4
      %s72 = int_to_ptr.vmem [resolvable:$true] %s71
      %74 = dma.vmem_to_hbm [thread:$0]  %s72, 256, %s1, [#allocation4]
    $region13: #{tpu_custom_call.1} parent=1 // pred_fallthru
      _
    // Predicated region
    $region14: #{tpu_custom_call.1} parent=1 // pred_check
      _
    $region15: #{tpu_custom_call.1} parent=1 // pred_check_branch
      %76 = sbr.rel (0) target = $region17
    $region16: #{tpu_custom_call.1} parent=1 // pred_region
      %77 = dma.done [#allocation4], 256
    $region17: #{tpu_custom_call.1} parent=1 // pred_fallthru
      _
    %78 = vsyncpa [#allocation3], 1
    %79 = vsyncpa [#allocation4], 1

</llo_original>
